<compile_context>
chip_gen: v6e
topology: v6e:2x2x1
jax: 0.10.0
libtpu: 0.0.40
codegen_flags: <defaults>
</compile_context>

<pallas_src>
import functools

import jax
import jax.numpy as jnp
from jax import lax
from jax.experimental import pallas as pl
from jax.experimental.pallas import tpu as pltpu

INPUT_SIZE = 13
LAYER_SIZE = 15
LAYER_COUNT = 6      # number of hidden 15->15 linears
OUT_SIZE = 2

MAX_TILE = 8192      # per review: keep <=8192 so double-buffered blocks (~8.5 MiB) fit
                     # v5e's 16 MiB scoped-VMEM default (v6e/v7x have more headroom).
SMALL_BATCH = 1024   # below this, the plain-XLA path beats pallas_call fixed overhead.


def _round_up(n, m):
    return ((n + m - 1) // m) * m


def _neural_net_kernel(x_ref, w0t_ref, b0_ref, weff_ref, beff_ref, out_ref):
    # Linear(13->15) + the single surviving ReLU.  bf16 MXU operands, f32 accumulate.
    xb = x_ref[...].astype(jnp.bfloat16)
    h = jnp.dot(xb, w0t_ref[...], preferred_element_type=jnp.float32) + b0_ref[...]
    h = jnp.maximum(h, 0.0).astype(jnp.bfloat16)

    # Folded affine chain (6x 15->15 + 15->2 head collapsed offline) as ONE matmul.
    # Contract the feature axis of both operands -> (OUT_SIZE, TB): batch on the lane
    # axis, i.e. lane-dense unmasked stores.  This is a transposed-RHS matmul (same
    # pattern as q @ k.T in flash attention), which Mosaic lowers natively; if a future
    # toolchain materializes an explicit h transpose, restructure per the perf review.
    out_t = lax.dot_general(
        weff_ref[...], h,
        dimension_numbers=(((1,), (1,)), ((), ())),
        preferred_element_type=jnp.float32)
    out_ref[...] = (out_t + beff_ref[...]).astype(out_ref.dtype)


def _fold_params(params):
    """Fold the activation-free affine chain into one (OUT_SIZE, LAYER_SIZE) affine.

    Returns f32 (w0t, b0_row, weff, beff); w0t pre-transposed so there is no in-kernel .T.
    """
    w0, b0, wmid, bmid, wlast, blast = params
    W = wmid[0]
    b = bmid[0]
    for i in range(1, LAYER_COUNT):
        W = wmid[i] @ W
        b = b @ wmid[i].T + bmid[i]
    W = wlast @ W                       # (OUT_SIZE, LAYER_SIZE)
    b = b @ wlast.T + blast             # (OUT_SIZE,)
    return jnp.transpose(w0), b0.reshape(1, LAYER_SIZE), W, b


@functools.partial(jax.jit, static_argnames=("max_tile", "small_batch_threshold"))
def neural_net_forward(x, params, *, max_tile=MAX_TILE,
                       small_batch_threshold=SMALL_BATCH):
    """x: (B, INPUT_SIZE) float32.  Returns (B, OUT_SIZE) float32."""
    w0t, b0, weff, beff = _fold_params(params)
    B = x.shape[0]

    # Small-batch fast path (review item): at scheduler-sized batches the pallas_call
    # launch, padding, and final transpose dominate sub-microsecond compute.
    if B <= small_batch_threshold:
        h = jnp.maximum(x @ w0t + b0, 0.0)
        return h @ weff.T + beff[None, :]

    # Tile selection: as large as possible (amortize the ~0.35us/step pipeline overhead),
    # capped at MAX_TILE for VMEM and at ceil(B/2) so the grid always has >=2 steps
    # (both v7x TensorCores get work under dimension_semantics=("parallel",)).
    TB = min(max_tile, _round_up(max((B + 1) // 2, 1), 128))
    Bp = _round_up(B, TB)
    if Bp != B:
        x = jnp.pad(x, ((0, Bp - B), (0, 0)))
    grid = (Bp // TB,)

    flops = 2 * Bp * (INPUT_SIZE * LAYER_SIZE + LAYER_SIZE * OUT_SIZE)
    bytes_accessed = (4 * (Bp * INPUT_SIZE + Bp * OUT_SIZE)
                      + 2 * (INPUT_SIZE * LAYER_SIZE + OUT_SIZE * LAYER_SIZE)
                      + 4 * (LAYER_SIZE + OUT_SIZE))

    out_t = pl.pallas_call(
        _neural_net_kernel,
        out_shape=jax.ShapeDtypeStruct((OUT_SIZE, Bp), jnp.float32),
        grid=grid,
        in_specs=[
            # Batch-tiled input, double-buffered across grid steps.  Cast to bf16 inside
            # the kernel so we don't pay a separate wrapper-side HBM pass over x.
            pl.BlockSpec((TB, INPUT_SIZE), lambda i: (i, 0)),
            # Weights / biases: full-array blocks, constant index_map -> VMEM-resident.
            pl.BlockSpec((INPUT_SIZE, LAYER_SIZE), lambda i: (0, 0)),
            pl.BlockSpec((1, LAYER_SIZE), lambda i: (0, 0)),
            pl.BlockSpec((OUT_SIZE, LAYER_SIZE), lambda i: (0, 0)),
            pl.BlockSpec((OUT_SIZE, 1), lambda i: (0, 0)),
        ],
        # Transposed output: batch on the lane axis -> unmasked, lane-dense stores.
        out_specs=pl.BlockSpec((OUT_SIZE, TB), lambda i: (0, i)),
        compiler_params=pltpu.CompilerParams(
            dimension_semantics=("parallel",)),
        cost_estimate=pl.CostEstimate(flops=flops, transcendentals=0,
                                      bytes_accessed=bytes_accessed),
    )(x, w0t.astype(jnp.bfloat16), b0,
      weff.astype(jnp.bfloat16), beff.reshape(OUT_SIZE, 1))

    # NOTE (perf review): if the consumer can accept a (2, B) layout, return
    # out_t[:, :B] directly and skip this extra XLA slice+transpose pass.
    return out_t[:, :B].T


def init_params(key):
    """Deterministic synthetic parameters (PyTorch Linear shapes, uniform init)."""
    ks = jax.random.split(key, 6)

    def uni(k, shape, fan_in):
        bound = 1.0 / jnp.sqrt(jnp.float32(fan_in))
        return jax.random.uniform(k, shape, jnp.float32, -bound, bound)

    w0 = uni(ks[0], (LAYER_SIZE, INPUT_SIZE), INPUT_SIZE)
    b0 = uni(ks[1], (LAYER_SIZE,), INPUT_SIZE)
    wmid = uni(ks[2], (LAYER_COUNT, LAYER_SIZE, LAYER_SIZE), LAYER_SIZE)
    bmid = uni(ks[3], (LAYER_COUNT, LAYER_SIZE), LAYER_SIZE)
    wlast = uni(ks[4], (OUT_SIZE, LAYER_SIZE), LAYER_SIZE)
    blast = uni(ks[5], (OUT_SIZE,), LAYER_SIZE)
    return w0, b0, wmid, bmid, wlast, blast


def reference_forward(x, params):
    """Pure-JAX f32 reference with the UNFOLDED layer structure (module semantics)."""
    w0, b0, wmid, bmid, wlast, blast = params
    h = jnp.maximum(x @ w0.T + b0, 0.0)
    for i in range(LAYER_COUNT):
        h = h @ wmid[i].T + bmid[i]
    return h @ wlast.T + blast


def folded_bf16_reference(x, params):
    """Pure-JAX reference matching the kernel numerics (folded chain, bf16 MXU inputs)."""
    w0t, b0, weff, beff = _fold_params(params)
    h = jnp.dot(x.astype(jnp.bfloat16), w0t.astype(jnp.bfloat16),
                preferred_element_type=jnp.float32) + b0
    h = jnp.maximum(h, 0.0)
    out = jnp.dot(h.astype(jnp.bfloat16), weff.astype(jnp.bfloat16).T,
                  preferred_element_type=jnp.float32)
    return out + beff[None, :]


if __name__ == "__main__":
    key = jax.random.PRNGKey(0)
    kx, kx2, kp = jax.random.split(key, 3)
    params = init_params(kp)

    # 1) Small batch forced through the Pallas kernel (single grid step).
    batch = 8
    x = jax.random.normal(kx, (batch, INPUT_SIZE), dtype=jnp.float32)
    out = jax.block_until_ready(
        neural_net_forward(x, params, small_batch_threshold=0))
    assert out.shape == (batch, OUT_SIZE), out.shape
    assert jnp.allclose(out, folded_bf16_reference(x, params),
                        atol=1e-4, rtol=1e-4), "mismatch vs folded bf16 reference"
    assert jnp.allclose(out, reference_forward(x, params),
                        atol=5e-2, rtol=5e-2), "mismatch vs unfolded f32 reference"

    # 2) Larger batch -> 2 grid steps (exercises pipelining / megacore path).
    batch2 = 300
    x2 = jax.random.normal(kx2, (batch2, INPUT_SIZE), dtype=jnp.float32)
    out2 = jax.block_until_ready(
        neural_net_forward(x2, params, small_batch_threshold=0))
    assert out2.shape == (batch2, OUT_SIZE), out2.shape
    assert jnp.allclose(out2, folded_bf16_reference(x2, params),
                        atol=1e-4, rtol=1e-4), "mismatch on multi-tile batch"

    # 3) Default small-batch XLA fast path (exact f32 numerics).
    out3 = jax.block_until_ready(neural_net_forward(x, params))
    assert jnp.allclose(out3, reference_forward(x, params),
                        atol=1e-4, rtol=1e-4), "fast-path mismatch"

    print("KERNEL_OK")
</pallas_src>

<mosaic_0001>
module attributes {stable_mosaic.version = 11 : i64} {
  func.func @_neural_net_kernel(%arg0: i32, %arg1: memref<128x13xf32, #tpu.memory_space<vmem>>, %arg2: memref<13x15xbf16, #tpu.memory_space<vmem>>, %arg3: memref<1x15xf32, #tpu.memory_space<vmem>>, %arg4: memref<2x15xbf16, #tpu.memory_space<vmem>>, %arg5: memref<2x1xf32, #tpu.memory_space<vmem>>, %arg6: memref<2x128xf32, #tpu.memory_space<vmem>>) attributes {dimension_semantics = [#tpu.dimension_semantics<parallel>], iteration_bounds = array<i64: 1>, scalar_prefetch = 0 : i64, scratch_operands = 0 : i64, tpu.core_type = #tpu.core_type<tc>, window_params = [{transform_indices = @transform_0, window_bounds = array<i64: 128, 13>}, {pipeline_mode = #tpu.pipeline_mode<synchronous>, transform_indices = @transform_1, window_bounds = array<i64: 13, 15>}, {pipeline_mode = #tpu.pipeline_mode<synchronous>, transform_indices = @transform_2, window_bounds = array<i64: 1, 15>}, {pipeline_mode = #tpu.pipeline_mode<synchronous>, transform_indices = @transform_3, window_bounds = array<i64: 2, 15>}, {pipeline_mode = #tpu.pipeline_mode<synchronous>, transform_indices = @transform_4, window_bounds = array<i64: 2, 1>}, {transform_indices = @transform_5, window_bounds = array<i64: 2, 128>}]} {
    %c0 = arith.constant 0 : index
    %c0_0 = arith.constant 0 : index
    %0 = vector.load %arg1[%c0, %c0_0] : memref<128x13xf32, #tpu.memory_space<vmem>>, vector<128x13xf32>
    %1 = arith.truncf %0 : vector<128x13xf32> to vector<128x13xbf16>
    %c0_1 = arith.constant 0 : index
    %c0_2 = arith.constant 0 : index
    %2 = vector.load %arg2[%c0_1, %c0_2] : memref<13x15xbf16, #tpu.memory_space<vmem>>, vector<13x15xbf16>
    %cst = arith.constant dense<0.000000e+00> : vector<128x15xf32>
    %3 = tpu.matmul %1, %2, %cst {dimension_numbers = #tpu.dot_dimension_numbers<[1], [0], [0], [1], [0, 0, 1, 1], [], []>} : vector<128x13xbf16>, vector<13x15xbf16>, vector<128x15xf32> -> vector<128x15xf32>
    %c0_3 = arith.constant 0 : index
    %c0_4 = arith.constant 0 : index
    %4 = vector.load %arg3[%c0_3, %c0_4] : memref<1x15xf32, #tpu.memory_space<vmem>>, vector<1x15xf32>
    %5 = vector.broadcast %4 : vector<1x15xf32> to vector<128x15xf32>
    %6 = arith.addf %3, %5 : vector<128x15xf32>
    %cst_5 = arith.constant 0.000000e+00 : f32
    %7 = vector.broadcast %cst_5 : f32 to vector<128x15xf32>
    %8 = arith.maximumf %6, %7 : vector<128x15xf32>
    %9 = arith.truncf %8 : vector<128x15xf32> to vector<128x15xbf16>
    %c0_6 = arith.constant 0 : index
    %c0_7 = arith.constant 0 : index
    %10 = vector.load %arg4[%c0_6, %c0_7] : memref<2x15xbf16, #tpu.memory_space<vmem>>, vector<2x15xbf16>
    %cst_8 = arith.constant dense<0.000000e+00> : vector<2x128xf32>
    %11 = tpu.matmul %10, %9, %cst_8 {dimension_numbers = #tpu.dot_dimension_numbers<[1], [1], [0], [0], [0, 0, 1, 0], [], []>} : vector<2x15xbf16>, vector<128x15xbf16>, vector<2x128xf32> -> vector<2x128xf32>
    %c0_9 = arith.constant 0 : index
    %c0_10 = arith.constant 0 : index
    %12 = vector.load %arg5[%c0_9, %c0_10] : memref<2x1xf32, #tpu.memory_space<vmem>>, vector<2x1xf32>
    %13 = vector.broadcast %12 : vector<2x1xf32> to vector<2x128xf32>
    %14 = arith.addf %11, %13 : vector<2x128xf32>
    %c0_11 = arith.constant 0 : index
    %c0_12 = arith.constant 0 : index
    %15 = vector.load %arg6[%c0_11, %c0_12] : memref<2x128xf32, #tpu.memory_space<vmem>>, vector<2x128xf32>
    tpu.vector_store %arg6[%c0_11, %c0_12], %14 {strides = array<i32>} : memref<2x128xf32, #tpu.memory_space<vmem>>, vector<2x128xf32>,
    return
  }
  func.func @transform_0(%arg0: i32) -> (i32, i32) {
    %c0_i32 = arith.constant 0 : i32
    %c0_i32_0 = arith.constant 0 : i32
    return %arg0, %c0_i32 : i32, i32
  }
  func.func @transform_1(%arg0: i32) -> (i32, i32) {
    %c0_i32 = arith.constant 0 : i32
    %c0_i32_0 = arith.constant 0 : i32
    %c0_i32_1 = arith.constant 0 : i32
    return %c0_i32, %c0_i32_0 : i32, i32
  }
  func.func @transform_2(%arg0: i32) -> (i32, i32) {
    %c0_i32 = arith.constant 0 : i32
    %c0_i32_0 = arith.constant 0 : i32
    %c0_i32_1 = arith.constant 0 : i32
    return %c0_i32, %c0_i32_0 : i32, i32
  }
  func.func @transform_3(%arg0: i32) -> (i32, i32) {
    %c0_i32 = arith.constant 0 : i32
    %c0_i32_0 = arith.constant 0 : i32
    %c0_i32_1 = arith.constant 0 : i32
    return %c0_i32, %c0_i32_0 : i32, i32
  }
  func.func @transform_4(%arg0: i32) -> (i32, i32) {
    %c0_i32 = arith.constant 0 : i32
    %c0_i32_0 = arith.constant 0 : i32
    %c0_i32_1 = arith.constant 0 : i32
    return %c0_i32, %c0_i32_0 : i32, i32
  }
  func.func @transform_5(%arg0: i32) -> (i32, i32) {
    %c0_i32 = arith.constant 0 : i32
    %c0_i32_0 = arith.constant 0 : i32
    return %c0_i32, %arg0 : i32, i32
  }
}

</mosaic_0001>

<llo_original>
// kernel: neural_net_forward.1
$region0: #{neural_net_forward.1}
  #allocation0 [shape = 'u32[]', space=smem, size = 0x4, offset = 0x4, fixed_abs, tag = 'smem constant byte address 0x4 - core index']
  #allocation1 [shape = 'u32[144,128]{1,0:T(1,128)}', space=vmem, size = 0x12000, scoped, tag = 'internal scratch']
  %s0 = inlined_call_operand.vmem [shape: f32[128,13], index: 0, kind: input, shape index: {}]
  %s1 = inlined_call_operand.vmem [shape: bf16[13,15], index: 1, kind: input, shape index: {}]
  %s2 = inlined_call_operand.vmem [shape: f32[1,15], index: 2, kind: input, shape index: {}]
  %s3 = inlined_call_operand.vmem [shape: bf16[2,15], index: 3, kind: input, shape index: {}]
  %s4 = inlined_call_operand.vmem [shape: f32[2,1], index: 4, kind: input, shape index: {}]
  %s5 = inlined_call_operand.vmem [shape: f32[2,128], index: 5, kind: output, shape index: {}]
  %s6 = sld [smem:[#allocation0]]
  $region30: #{neural_net_forward.1} parent=0
    _
  %s8 = ssub.s32 1, %s6
  %s9 = scalar_select 0, %s8, %s6
  // Predicated region
  $region2: #{neural_net_forward.1} parent=0 // pred_check
    _
  $region3: #{neural_net_forward.1} parent=0 // pred_check_branch
    %11 = sbr.rel (0) target = $region5
  $region4: #{neural_net_forward.1} parent=0 // pred_region
    _
  $region5: #{neural_net_forward.1} parent=0 // pred_fallthru
    _
  // Predicated region
  $region6: #{neural_net_forward.1} parent=0 // pred_check
    _
  $region7: #{neural_net_forward.1} parent=0 // pred_check_branch
    %13 = sbr.rel (0) target = $region9
  $region8: #{neural_net_forward.1} parent=0 // pred_region
    _
  $region9: #{neural_net_forward.1} parent=0 // pred_fallthru
    _
  // Predicated region
  $region10: #{neural_net_forward.1} parent=0 // pred_check
    _
  $region11: #{neural_net_forward.1} parent=0 // pred_check_branch
    %15 = sbr.rel (0) target = $region13
  $region12: #{neural_net_forward.1} parent=0 // pred_region
    _
  $region13: #{neural_net_forward.1} parent=0 // pred_fallthru
    _
  // Predicated region
  $region14: #{neural_net_forward.1} parent=0 // pred_check
    _
  $region15: #{neural_net_forward.1} parent=0 // pred_check_branch
    %17 = sbr.rel (0) target = $region17
  $region16: #{neural_net_forward.1} parent=0 // pred_region
    _
  $region17: #{neural_net_forward.1} parent=0 // pred_fallthru
    _
  // Predicated region
  $region18: #{neural_net_forward.1} parent=0 // pred_check
    _
  $region19: #{neural_net_forward.1} parent=0 // pred_check_branch
    %19 = sbr.rel (0) target = $region21
  $region20: #{neural_net_forward.1} parent=0 // pred_region
    _
  $region21: #{neural_net_forward.1} parent=0 // pred_fallthru
    _
  %v21 = vld [vmem:[%s0] sm:$0xff]
  %v22 = vld [vmem:[%s0 + $0x8] sm:$0xff]
  %v23 = vld [vmem:[%s0 + $0x10] sm:$0xff]
  %v24 = vld [vmem:[%s0 + $0x18] sm:$0xff]
  %v25 = vld [vmem:[%s0 + $0x20] sm:$0xff]
  %v26 = vld [vmem:[%s0 + $0x28] sm:$0xff]
  %v27 = vld [vmem:[%s0 + $0x30] sm:$0xff]
  %v28 = vld [vmem:[%s0 + $0x38] sm:$0xff]
  %v29 = vld [vmem:[%s0 + $0x40] sm:$0xff]
  %v30 = vld [vmem:[%s0 + $0x48] sm:$0xff]
  %v31 = vld [vmem:[%s0 + $0x50] sm:$0xff]
  %v32 = vld [vmem:[%s0 + $0x58] sm:$0xff]
  %v33 = vld [vmem:[%s0 + $0x60] sm:$0xff]
  %v34 = vld [vmem:[%s0 + $0x68] sm:$0xff]
  %v35 = vld [vmem:[%s0 + $0x70] sm:$0xff]
  %v36 = vld [vmem:[%s0 + $0x78] sm:$0xff]
  %v37 = vpack.c.bf16 %v22, %v21
  %v38 = vpack.c.bf16 %v24, %v23
  %v39 = vpack.c.bf16 %v26, %v25
  %v40 = vpack.c.bf16 %v28, %v27
  %v41 = vpack.c.bf16 %v30, %v29
  %v42 = vpack.c.bf16 %v32, %v31
  %v43 = vpack.c.bf16 %v34, %v33
  %v44 = vpack.c.bf16 %v36, %v35
  %v45 = vld [vmem:[%s1] sm:$0xf]
  %v46 = vld [vmem:[%s1 + $0x4] sm:$0x7]
  %v47 = vld [vmem:[%s2] sm:$0x1]
  %v49 = vlaneseq
  %v50 = vshrl.u32 %v49, 7
  %v51 = vsub.s32 0, %v50
  %v52 = vrot.slane %v47, %v51
  %v56 = vunpack.c.l.b16 %v45
  %v57 = vunpack.c.l.b16 %v46
  %v58 = vpack.c.b16 %v57, %v56
  %vm59 = vcmask 105472
  %v61 = vsel %vm59, %v37, 0
  %v64 = vsel %vm59, %v38, 0
  %v67 = vsel %vm59, %v39, 0
  %v70 = vsel %vm59, %v40, 0
  %v73 = vsel %vm59, %v41, 0
  %v76 = vsel %vm59, %v42, 0
  %v79 = vsel %vm59, %v43, 0
  %v82 = vsel %vm59, %v44, 0
  %vm84 = vcmask 1045504
  %vm85 = vcmask 1046528
  %v86 = vsel %vm84, 4294967295, 65535
  %v87 = vsel %vm85, %v86, 0
  %v89 = vand.u32 %v58, %v87
  %91 = vmatprep.subr.bf16.mxu0 0
  %92 = vmatpush1.bf16.msra.mxu0 0
  %93 = vmatprep.subr.bf16.mxu0 0
  %94 = vmatpush1.bf16.msra.mxu0 0
  %95 = vmatprep.subr.bf16.mxu0 0
  %96 = vmatpush1.bf16.msra.mxu0 0
  %97 = vmatprep.subr.bf16.mxu0 0
  %98 = vmatpush1.bf16.msra.mxu0 0
  %99 = vmatprep.subr.bf16.mxu0 0
  %100 = vmatpush1.bf16.msra.mxu0 0
  %101 = vmatprep.subr.bf16.mxu0 0
  %102 = vmatpush1.bf16.msra.mxu0 0
  %103 = vmatprep.subr.bf16.mxu0 0
  %104 = vmatpush1.bf16.msra.mxu0 0
  %105 = vmatprep.subr.bf16.mxu0 0
  %106 = vmatpush1.bf16.msra.mxu0 %v89
  %107 = vmatprep.subr.bf16.mxu0 0
  %108 = vmatpush2.bf16.msra.mxu0 0
  %109 = vmatprep.subr.bf16.mxu0 0
  %110 = vmatpush2.bf16.msra.mxu0 0
  %111 = vmatprep.subr.bf16.mxu0 0
  %112 = vmatpush2.bf16.msra.mxu0 0
  %113 = vmatprep.subr.bf16.mxu0 0
  %114 = vmatpush2.bf16.msra.mxu0 0
  %115 = vmatprep.subr.bf16.mxu0 0
  %116 = vmatpush2.bf16.msra.mxu0 0
  %117 = vmatprep.subr.bf16.mxu0 0
  %118 = vmatpush2.bf16.msra.mxu0 0
  %119 = vmatprep.subr.bf16.mxu0 0
  %120 = vmatpush2.bf16.msra.mxu0 0
  %121 = vmatprep.subr.bf16.mxu0 0
  %122 = vmatpush2.bf16.msra.mxu0 0
  %123 = vmatprep.mubr.bf16.mxu0 0
  %124 = vmatmul.mubr.bf16.gmra.mxu0 %v61
  %v125 = vpop.f32.mrf.mxu0
  %v126 = vadd.f32 %v52, %v125
  %v127 = vpop.f32.mrf.mxu0
  %v128 = vpop.f32.mrf.mxu0
  %v129 = vadd.f32 %v52, %v128
  %v130 = vpop.f32.mrf.mxu0
  %131 = vmatprep.mubr.bf16.mxu0 0
  %132 = vmatmul.mubr.bf16.gmra.mxu0 %v64
  %v133 = vpop.f32.mrf.mxu0
  %v134 = vadd.f32 %v52, %v133
  %v135 = vpop.f32.mrf.mxu0
  %v136 = vpop.f32.mrf.mxu0
  %v137 = vadd.f32 %v52, %v136
  %v138 = vpop.f32.mrf.mxu0
  %139 = vmatprep.mubr.bf16.mxu0 0
  %140 = vmatmul.mubr.bf16.gmra.mxu0 %v67
  %v141 = vpop.f32.mrf.mxu0
  %v142 = vadd.f32 %v52, %v141
  %v143 = vpop.f32.mrf.mxu0
  %v144 = vpop.f32.mrf.mxu0
  %v145 = vadd.f32 %v52, %v144
  %v146 = vpop.f32.mrf.mxu0
  %147 = vmatprep.mubr.bf16.mxu0 0
  %148 = vmatmul.mubr.bf16.gmra.mxu0 %v70
  %v149 = vpop.f32.mrf.mxu0
  %v150 = vadd.f32 %v52, %v149
  %v151 = vpop.f32.mrf.mxu0
  %v152 = vpop.f32.mrf.mxu0
  %v153 = vadd.f32 %v52, %v152
  %v154 = vpop.f32.mrf.mxu0
  %155 = vmatprep.mubr.bf16.mxu0 0
  %156 = vmatmul.mubr.bf16.gmra.mxu0 %v73
  %v157 = vpop.f32.mrf.mxu0
  %v158 = vadd.f32 %v52, %v157
  %v159 = vpop.f32.mrf.mxu0
  %v160 = vpop.f32.mrf.mxu0
  %v161 = vadd.f32 %v52, %v160
  %v162 = vpop.f32.mrf.mxu0
  %163 = vmatprep.mubr.bf16.mxu0 0
  %164 = vmatmul.mubr.bf16.gmra.mxu0 %v76
  %v165 = vpop.f32.mrf.mxu0
  %v166 = vadd.f32 %v52, %v165
  %v167 = vpop.f32.mrf.mxu0
  %v168 = vpop.f32.mrf.mxu0
  %v169 = vadd.f32 %v52, %v168
  %v170 = vpop.f32.mrf.mxu0
  %171 = vmatprep.mubr.bf16.mxu0 0
  %172 = vmatmul.mubr.bf16.gmra.mxu0 %v79
  %v173 = vpop.f32.mrf.mxu0
  %v174 = vadd.f32 %v52, %v173
  %v175 = vpop.f32.mrf.mxu0
  %v176 = vpop.f32.mrf.mxu0
  %v177 = vadd.f32 %v52, %v176
  %v178 = vpop.f32.mrf.mxu0
  %179 = vmatprep.mubr.bf16.mxu0 0
  %180 = vmatmul.mubr.bf16.gmra.mxu0 %v82
  %v181 = vpop.f32.mrf.mxu0
  %v182 = vadd.f32 %v52, %v181
  %v183 = vpop.f32.mrf.mxu0
  %v184 = vpop.f32.mrf.mxu0
  %v185 = vadd.f32 %v52, %v184
  %v186 = vpop.f32.mrf.mxu0
  %187 = vdwg.mxu0
  %v188 = vmax.f32 %v126, 0.0
  %v189 = vmax.f32 %v129, 0.0
  %v190 = vmax.f32 %v134, 0.0
  %v191 = vmax.f32 %v137, 0.0
  %v192 = vmax.f32 %v142, 0.0
  %v193 = vmax.f32 %v145, 0.0
  %v194 = vmax.f32 %v150, 0.0
  %v195 = vmax.f32 %v153, 0.0
  %v196 = vmax.f32 %v158, 0.0
  %v197 = vmax.f32 %v161, 0.0
  %v198 = vmax.f32 %v166, 0.0
  %v199 = vmax.f32 %v169, 0.0
  %v200 = vmax.f32 %v174, 0.0
  %v201 = vmax.f32 %v177, 0.0
  %v202 = vmax.f32 %v182, 0.0
  %v203 = vmax.f32 %v185, 0.0
  %v204 = vpack.c.bf16 %v189, %v188
  %v205 = vpack.c.bf16 %v191, %v190
  %v206 = vpack.c.bf16 %v193, %v192
  %v207 = vpack.c.bf16 %v195, %v194
  %v208 = vpack.c.bf16 %v197, %v196
  %v209 = vpack.c.bf16 %v199, %v198
  %v210 = vpack.c.bf16 %v201, %v200
  %v211 = vpack.c.bf16 %v203, %v202
  %v212 = vld [vmem:[%s3] sm:$0x1]
  %v213 = vld [vmem:[%s4] sm:$0x3]
  %215 = vset.pattern.permute.xlu0 0
  %216 = vperm.xlu0 %215, %v213
  %v217 = vpop.permute.xlu0 %216
  %vm219 = vcmask 121856
  %v221 = vsel %vm219, %v212, 0
  %v224 = vsel %vm219, %v204, 0
  %v227 = vsel %vm219, %v205, 0
  %v230 = vsel %vm219, %v206, 0
  %v233 = vsel %vm219, %v207, 0
  %v236 = vsel %vm219, %v208, 0
  %v239 = vsel %vm219, %v209, 0
  %v242 = vsel %vm219, %v210, 0
  %v245 = vsel %vm219, %v211, 0
  %247 = vmatprep.subr.bf16.mxu0 0
  %248 = vmatpush1.bf16.xpose.msra.mxu0 %v245
  %249 = vmatprep.subr.bf16.mxu0 0
  %250 = vmatpush1.bf16.xpose.msra.mxu0 %v242
  %251 = vmatprep.subr.bf16.mxu0 0
  %252 = vmatpush1.bf16.xpose.msra.mxu0 %v239
  %253 = vmatprep.subr.bf16.mxu0 0
  %254 = vmatpush1.bf16.xpose.msra.mxu0 %v236
  %255 = vmatprep.subr.bf16.mxu0 0
  %256 = vmatpush1.bf16.xpose.msra.mxu0 %v233
  %257 = vmatprep.subr.bf16.mxu0 0
  %258 = vmatpush1.bf16.xpose.msra.mxu0 %v230
  %259 = vmatprep.subr.bf16.mxu0 0
  %260 = vmatpush1.bf16.xpose.msra.mxu0 %v227
  %261 = vmatprep.subr.bf16.mxu0 0
  %262 = vmatpush1.bf16.xpose.msra.mxu0 %v224
  %263 = vmatprep.subr.bf16.mxu0 0
  %264 = vmatpush2.bf16.xpose.msra.mxu0 0
  %265 = vmatprep.subr.bf16.mxu0 0
  %266 = vmatpush2.bf16.xpose.msra.mxu0 0
  %267 = vmatprep.subr.bf16.mxu0 0
  %268 = vmatpush2.bf16.xpose.msra.mxu0 0
  %269 = vmatprep.subr.bf16.mxu0 0
  %270 = vmatpush2.bf16.xpose.msra.mxu0 0
  %271 = vmatprep.subr.bf16.mxu0 0
  %272 = vmatpush2.bf16.xpose.msra.mxu0 0
  %273 = vmatprep.subr.bf16.mxu0 0
  %274 = vmatpush2.bf16.xpose.msra.mxu0 0
  %275 = vmatprep.subr.bf16.mxu0 0
  %276 = vmatpush2.bf16.xpose.msra.mxu0 0
  %277 = vmatprep.subr.bf16.mxu0 0
  %278 = vmatpush2.bf16.xpose.msra.mxu0 0
  %279 = vmatprep.mubr.bf16.mxu0 0
  %280 = vmatmul.mubr.bf16.gmra.mxu0 %v221
  %v281 = vpop.f32.mrf.mxu0
  %v282 = vadd.f32 %v217, %v281
  %v283 = vpop.f32.mrf.mxu0
  %v284 = vpop.f32.mrf.mxu0
  %v285 = vpop.f32.mrf.mxu0
  %286 = vdwg.mxu0
  %287 = vst [vmem:[%s5] sm:$0x3] %v282
  // Predicated region
  $region22: #{neural_net_forward.1} parent=0 // pred_check
    _
  $region23: #{neural_net_forward.1} parent=0 // pred_check_branch
    %289 = sbr.rel (0) target = $region25
  $region24: #{neural_net_forward.1} parent=0 // pred_region
    _
  $region25: #{neural_net_forward.1} parent=0 // pred_fallthru
    _
  // Predicated region
  $region26: #{neural_net_forward.1} parent=0 // pred_check
    _
  $region27: #{neural_net_forward.1} parent=0 // pred_check_branch
    %291 = sbr.rel (0) target = $region29
  $region28: #{neural_net_forward.1} parent=0 // pred_region
    _
  $region29: #{neural_net_forward.1} parent=0 // pred_fallthru
    _

</llo_original>
